<compile_context>
chip_gen: v7x
topology: tpu7x:2x2x1
jax: 0.10.0
libtpu: 0.0.40
codegen_flags: <defaults>
</compile_context>

<pallas_src>
import jax
import jax.numpy as jnp
from jax.experimental import pallas as pl
from jax.experimental.pallas import tpu as pltpu

LN_EPS = 1e-5        # torch nn.LayerNorm default eps
OUT_LANES = 128      # lane-dense output slab width


def _round_up(x, m):
    return ((x + m - 1) // m) * m


def _recip(x):
    # EUP approx reciprocal (free slot) + one Newton step to restore ~f32 accuracy.
    r = pl.reciprocal(x, approx=True)
    return r * (2.0 - x * r)


def attention_ln_prev_kernel(h_ref, enc_ref, prev_ref, dw_ref, sp_ref, wd_ref,
                             out_ref):
    """One grid step over TB batch rows; all parameters VMEM-resident.

    h_ref   : (TB, D)      f32   attn_hidden tile
    enc_ref : (TB, W, D)   bf16  enc_outs tile (widened to f32 in-kernel)
    prev_ref: (TB, P)      f32   prev_info tile
    dw_ref  : (D, W + H)   f32   [w_attn | w_comb_enc]   (in, out) layout
    sp_ref  : (5 + P, VH)  f32   rows: b_attn, b_comb, ln_gamma, ln_beta,
                                  b_dec, w_comb_prev[0..P-1] (lane padded)
    wd_ref  : (H, O)       f32   dec_linear weight, (in, out) layout
    out_ref : (TB, 128)    f32   [softmax out | attn weights | zero pad]
    """
    TB, D = h_ref.shape
    W = enc_ref.shape[1]
    H, O = wd_ref.shape
    P = prev_ref.shape[1]

    h = h_ref[...]

    # ---- attn: Linear(D -> W) + softmax over the window axis (torch dim=1) --
    logits = jnp.dot(h, dw_ref[:, :W], preferred_element_type=jnp.float32)
    logits = logits + sp_ref[0:1, :W]
    logits = logits - jnp.max(logits, axis=-1, keepdims=True)
    e = jnp.exp(logits)
    attn_w = e * _recip(jnp.sum(e, axis=-1, keepdims=True))           # (TB, W)

    # ---- bmm(attn_w.unsqueeze(1), enc_outs): W unrolled FMAs, f32 accum -----
    applied = attn_w[:, 0:1] * enc_ref[:, 0, :].astype(jnp.float32)   # (TB, D)
    for wi in range(1, W):
        applied = applied + attn_w[:, wi:wi + 1] * enc_ref[:, wi, :].astype(jnp.float32)

    # ---- attn_combine: Linear(D+P -> H); the cat is folded into split weights
    comb = jnp.dot(applied, dw_ref[:, W:W + H], preferred_element_type=jnp.float32)
    comb = comb + sp_ref[1:2, :H]
    prev = prev_ref[...].astype(jnp.float32)
    for pi in range(P):                                  # prev part: P VPU FMAs
        comb = comb + prev[:, pi:pi + 1] * sp_ref[5 + pi:6 + pi, :H]
    comb = jnp.maximum(comb, 0.0)                        # attn_relu

    # ---- dec_ln: LayerNorm over H (biased variance, eps inside sqrt) --------
    mean = jnp.mean(comb, axis=-1, keepdims=True)
    cen = comb - mean
    var = jnp.mean(cen * cen, axis=-1, keepdims=True)
    normed = cen * jax.lax.rsqrt(var + LN_EPS)
    normed = normed * sp_ref[2:3, :H] + sp_ref[3:4, :H]

    # ---- dec_linear + dec_relu + softmax over output axis (torch dim=2) -----
    dec = jnp.dot(normed, wd_ref[...], preferred_element_type=jnp.float32)
    dec = dec + sp_ref[4:5, :O]
    dec = jnp.maximum(dec, 0.0)
    dec = dec - jnp.max(dec, axis=-1, keepdims=True)
    de = jnp.exp(dec)
    out_sm = de * _recip(jnp.sum(de, axis=-1, keepdims=True))         # (TB, O)

    # ---- single lane-dense output slab: [out | attn_w | zeros] --------------
    out_ref[...] = jnp.zeros(out_ref.shape, out_ref.dtype)
    out_ref[:, :O] = out_sm.astype(out_ref.dtype)
    out_ref[:, O:O + W] = attn_w.astype(out_ref.dtype)


def attention_ln_prev_classifier_forward(attn_hidden, enc_outs, prev_info, params,
                                         *, batch_tile=128):
    """Fused forward pass. Returns (output (B,1,O), attn_weights (B,W))."""
    B, D = attn_hidden.shape
    W = enc_outs.shape[1]
    prev = prev_info.reshape(B, -1).astype(jnp.float32)
    P = prev.shape[1]
    H, O = params["w_dec"].shape
    assert O + W <= OUT_LANES

    # Batch tiling: TB multiple of 8 (f32 sublane), capped at batch_tile (=128).
    TB = min(batch_tile, _round_up(B, 8))
    B_pad = _round_up(B, TB)
    nb = B_pad // TB

    def padb(x):
        if x.shape[0] == B_pad:
            return x
        return jnp.pad(x, [(0, B_pad - B)] + [(0, 0)] * (x.ndim - 1))

    h = padb(attn_hidden.astype(jnp.float32))
    enc = padb(enc_outs)                 # keep caller dtype (bf16 recommended)
    pv = padb(prev)

    # Pack parameters into 3 VMEM-resident blocks (cuts DMA descriptor count).
    VH = max(W, H, O)

    def row(v):
        v = v.reshape(1, -1).astype(jnp.float32)
        return jnp.pad(v, ((0, 0), (0, VH - v.shape[1])))

    dw = jnp.concatenate([params["w_attn"], params["w_comb_enc"]],
                         axis=1).astype(jnp.float32)                    # (D, W+H)
    sp = jnp.concatenate(
        [row(params["b_attn"]), row(params["b_comb"]),
         row(params["ln_gamma"]), row(params["ln_beta"]), row(params["b_dec"]),
         jnp.pad(params["w_comb_prev"].astype(jnp.float32),
                 ((0, 0), (0, VH - H)))],
        axis=0)                                                         # (5+P, VH)
    wd = params["w_dec"].astype(jnp.float32)                            # (H, O)

    enc_bytes = int(enc.size) * jnp.dtype(enc.dtype).itemsize
    cost = pl.CostEstimate(
        flops=int(2 * B_pad * (2 * D * W + (D + P) * H + H * O)),
        transcendentals=int(B_pad * (W + O + 3)),
        bytes_accessed=int(enc_bytes + 4 * (h.size + pv.size + dw.size + sp.size
                                            + wd.size + B_pad * OUT_LANES)),
    )

    out_slab = pl.pallas_call(
        attention_ln_prev_kernel,
        out_shape=jax.ShapeDtypeStruct((B_pad, OUT_LANES), jnp.float32),
        grid=(nb,),
        in_specs=[
            pl.BlockSpec((TB, D), lambda i: (i, 0)),
            pl.BlockSpec((TB, W, D), lambda i: (i, 0, 0)),
            pl.BlockSpec((TB, P), lambda i: (i, 0)),
            # Constant index maps -> parameter blocks stay resident in VMEM.
            pl.BlockSpec((D, W + H), lambda i: (0, 0)),
            pl.BlockSpec((5 + P, VH), lambda i: (0, 0)),
            pl.BlockSpec((H, O), lambda i: (0, 0)),
        ],
        out_specs=pl.BlockSpec((TB, OUT_LANES), lambda i: (i, 0)),
        compiler_params=pltpu.CompilerParams(
            dimension_semantics=("parallel",)),
        cost_estimate=cost,
    )(h, enc, pv, dw, sp, wd)

    out = out_slab[:B, :O].reshape(B, 1, O)
    attn_w = out_slab[:B, O:O + W]
    return out, attn_w


def init_params(key, output_size, hidden_size, window_size, bidir, prev_size=2):
    """PyTorch-style uniform(+-1/sqrt(fan_in)) init; weights stored (in, out).

    attn_combine's Linear(D+P, H) weight is generated whole and split into the
    D-row part (MXU matmul) and the P-row part (prev VPU FMAs) — identical math
    to torch's cat-then-matmul.
    """
    d = 2 * hidden_size if bidir else hidden_size

    def linear(k, fan_in, fan_out):
        k1, k2 = jax.random.split(k)
        bound = 1.0 / float(fan_in) ** 0.5
        w = jax.random.uniform(k1, (fan_in, fan_out), jnp.float32, -bound, bound)
        b = jax.random.uniform(k2, (fan_out,), jnp.float32, -bound, bound)
        return w, b

    k1, k2, k3, k4, k5 = jax.random.split(key, 5)
    w_attn, b_attn = linear(k1, d, window_size)
    w_comb, b_comb = linear(k2, d + prev_size, hidden_size)
    w_dec, b_dec = linear(k3, hidden_size, output_size)
    # torch LayerNorm defaults to gamma=1/beta=0; perturb slightly so the
    # affine path is actually exercised by the correctness check.
    ln_gamma = 1.0 + 0.1 * jax.random.uniform(k4, (hidden_size,), jnp.float32, -1.0, 1.0)
    ln_beta = 0.1 * jax.random.uniform(k5, (hidden_size,), jnp.float32, -1.0, 1.0)
    return dict(w_attn=w_attn, b_attn=b_attn,
                w_comb_enc=w_comb[:d], w_comb_prev=w_comb[d:], b_comb=b_comb,
                ln_gamma=ln_gamma, ln_beta=ln_beta,
                w_dec=w_dec, b_dec=b_dec)


def reference_forward(attn_hidden, enc_outs, prev_info, p):
    """Plain-JAX mirror of the torch module (weights stored as (in, out))."""
    aw = jax.nn.softmax(attn_hidden @ p["w_attn"] + p["b_attn"], axis=1)
    applied = jnp.einsum("bw,bwd->bd", aw, enc_outs)[:, None, :]        # (B,1,D)
    x = jnp.concatenate([applied, prev_info], axis=2)                   # (B,1,D+P)
    w_comb = jnp.concatenate([p["w_comb_enc"], p["w_comb_prev"]], axis=0)
    x = jax.nn.relu(x @ w_comb + p["b_comb"])[:, 0, :]                  # (B,H)
    mean = jnp.mean(x, axis=-1, keepdims=True)
    var = jnp.mean((x - mean) ** 2, axis=-1, keepdims=True)
    x = (x - mean) * jax.lax.rsqrt(var + LN_EPS) * p["ln_gamma"] + p["ln_beta"]
    x = jax.nn.relu(x @ p["w_dec"] + p["b_dec"])
    out = jax.nn.softmax(x[:, None, :], axis=2)
    return out, aw


if __name__ == "__main__":
    OUTPUT_SIZE = 4
    HIDDEN_SIZE = 32
    WINDOW_SIZE = 8
    BIDIR = True
    PREV_SIZE = 2          # prev_info feature width implied by Linear(2H+2, H)
    D = 2 * HIDDEN_SIZE if BIDIR else HIDDEN_SIZE

    key = jax.random.PRNGKey(0)
    params = init_params(jax.random.fold_in(key, 0), OUTPUT_SIZE, HIDDEN_SIZE,
                         WINDOW_SIZE, BIDIR, PREV_SIZE)

    # Small case (module's MINI_BATCH=2) plus a larger batch that exercises the
    # multi-step batch grid / megacore-parallel path.
    for MINI_BATCH in (2, 256):
        kb = jax.random.fold_in(key, MINI_BATCH)
        kh, ke, kp = jax.random.split(kb, 3)
        attn_hidden = jax.random.normal(kh, (MINI_BATCH, D), jnp.float32)
        # enc_outs is the only B*W*D-sized tensor -> ship it as bf16.
        enc_outs = jax.random.normal(
            ke, (MINI_BATCH, WINDOW_SIZE, D), jnp.float32).astype(jnp.bfloat16)
        prev_info = jax.random.normal(kp, (MINI_BATCH, 1, PREV_SIZE), jnp.float32)

        out, attn_w = attention_ln_prev_classifier_forward(
            attn_hidden, enc_outs, prev_info, params)
        out = jax.block_until_ready(out)
        attn_w = jax.block_until_ready(attn_w)

        ref_out, ref_aw = reference_forward(
            attn_hidden, enc_outs.astype(jnp.float32), prev_info, params)
        assert out.shape == (MINI_BATCH, 1, OUTPUT_SIZE)
        assert attn_w.shape == (MINI_BATCH, WINDOW_SIZE)
        assert jnp.allclose(out, ref_out, atol=1e-5, rtol=1e-4), (
            f"output mismatch at B={MINI_BATCH}: "
            f"max abs err {jnp.max(jnp.abs(out - ref_out))}")
        assert jnp.allclose(attn_w, ref_aw, atol=1e-5, rtol=1e-4), (
            f"attn mismatch at B={MINI_BATCH}: "
            f"max abs err {jnp.max(jnp.abs(attn_w - ref_aw))}")

    print("KERNEL_OK")
</pallas_src>

<mosaic_0001>
module attributes {stable_mosaic.version = 11 : i64} {
  func.func @attention_ln_prev_kernel(%arg0: i32, %arg1: memref<8x64xf32, #tpu.memory_space<vmem>>, %arg2: memref<8x8x64xbf16, #tpu.memory_space<vmem>>, %arg3: memref<8x2xf32, #tpu.memory_space<vmem>>, %arg4: memref<64x40xf32, #tpu.memory_space<vmem>>, %arg5: memref<7x32xf32, #tpu.memory_space<vmem>>, %arg6: memref<32x4xf32, #tpu.memory_space<vmem>>, %arg7: memref<8x128xf32, #tpu.memory_space<vmem>>) attributes {dimension_semantics = [#tpu.dimension_semantics<parallel>], iteration_bounds = array<i64: 1>, scalar_prefetch = 0 : i64, scratch_operands = 0 : i64, tpu.core_type = #tpu.core_type<tc>, window_params = [{transform_indices = @transform_0, window_bounds = array<i64: 8, 64>}, {transform_indices = @transform_1, window_bounds = array<i64: 8, 8, 64>}, {transform_indices = @transform_2, window_bounds = array<i64: 8, 2>}, {pipeline_mode = #tpu.pipeline_mode<synchronous>, transform_indices = @transform_3, window_bounds = array<i64: 64, 40>}, {pipeline_mode = #tpu.pipeline_mode<synchronous>, transform_indices = @transform_4, window_bounds = array<i64: 7, 32>}, {pipeline_mode = #tpu.pipeline_mode<synchronous>, transform_indices = @transform_5, window_bounds = array<i64: 32, 4>}, {transform_indices = @transform_6, window_bounds = array<i64: 8, 128>}]} {
    %c0 = arith.constant 0 : index
    %c0_0 = arith.constant 0 : index
    %0 = vector.load %arg1[%c0, %c0_0] : memref<8x64xf32, #tpu.memory_space<vmem>>, vector<8x64xf32>
    %c0_1 = arith.constant 0 : index
    %c0_2 = arith.constant 0 : index
    %1 = vector.load %arg4[%c0_1, %c0_2] : memref<64x40xf32, #tpu.memory_space<vmem>>, vector<64x8xf32>
    %cst = arith.constant dense<0.000000e+00> : vector<8x8xf32>
    %2 = tpu.matmul %0, %1, %cst {dimension_numbers = #tpu.dot_dimension_numbers<[1], [0], [0], [1], [0, 0, 1, 1], [], []>} : vector<8x64xf32>, vector<64x8xf32>, vector<8x8xf32> -> vector<8x8xf32>
    %c0_3 = arith.constant 0 : index
    %c0_4 = arith.constant 0 : index
    %3 = vector.load %arg5[%c0_3, %c0_4] : memref<7x32xf32, #tpu.memory_space<vmem>>, vector<1x8xf32>
    %4 = vector.broadcast %3 : vector<1x8xf32> to vector<8x8xf32>
    %5 = arith.addf %2, %4 : vector<8x8xf32>
    %cst_5 = arith.constant dense<0xFF800000> : vector<8xf32>
    %6 = vector.multi_reduction <maximumf>, %5, %cst_5 [1] : vector<8x8xf32> to vector<8xf32>
    %7 = vector.shape_cast %6 : vector<8xf32> to vector<8x1xf32>
    %8 = vector.broadcast %7 : vector<8x1xf32> to vector<8x8xf32>
    %9 = arith.subf %5, %8 : vector<8x8xf32>
    %10 = math.exp %9 : vector<8x8xf32>
    %cst_6 = arith.constant dense<0.000000e+00> : vector<8xf32>
    %11 = vector.multi_reduction <add>, %10, %cst_6 [1] : vector<8x8xf32> to vector<8xf32>
    %12 = vector.shape_cast %11 : vector<8xf32> to vector<8x1xf32>
    %13 = tpu.reciprocal %12 {approx = true} : vector<8x1xf32> -> vector<8x1xf32>
    %14 = arith.mulf %12, %13 : vector<8x1xf32>
    %cst_7 = arith.constant 2.000000e+00 : f32
    %15 = vector.broadcast %cst_7 : f32 to vector<8x1xf32>
    %16 = arith.subf %15, %14 : vector<8x1xf32>
    %17 = arith.mulf %13, %16 : vector<8x1xf32>
    %18 = vector.broadcast %17 : vector<8x1xf32> to vector<8x8xf32>
    %19 = arith.mulf %10, %18 : vector<8x8xf32>
    %20 = vector.extract_strided_slice %19 {offsets = [0, 0], sizes = [8, 1], strides = [1, 1]} : vector<8x8xf32> to vector<8x1xf32>
    %c0_8 = arith.constant 0 : index
    %c0_9 = arith.constant 0 : index
    %c0_10 = arith.constant 0 : index
    %21 = vector.load %arg2[%c0_8, %c0_9, %c0_10] : memref<8x8x64xbf16, #tpu.memory_space<vmem>>, vector<8x1x64xbf16>
    %22 = vector.shape_cast %21 : vector<8x1x64xbf16> to vector<8x64xbf16>
    %23 = arith.extf %22 : vector<8x64xbf16> to vector<8x64xf32>
    %24 = vector.broadcast %20 : vector<8x1xf32> to vector<8x64xf32>
    %25 = arith.mulf %24, %23 : vector<8x64xf32>
    %26 = vector.extract_strided_slice %19 {offsets = [0, 1], sizes = [8, 1], strides = [1, 1]} : vector<8x8xf32> to vector<8x1xf32>
    %c0_11 = arith.constant 0 : index
    %c1 = arith.constant 1 : index
    %c0_12 = arith.constant 0 : index
    %27 = vector.load %arg2[%c0_11, %c1, %c0_12] : memref<8x8x64xbf16, #tpu.memory_space<vmem>>, vector<8x1x64xbf16>
    %28 = vector.shape_cast %27 : vector<8x1x64xbf16> to vector<8x64xbf16>
    %29 = arith.extf %28 : vector<8x64xbf16> to vector<8x64xf32>
    %30 = vector.broadcast %26 : vector<8x1xf32> to vector<8x64xf32>
    %31 = arith.mulf %30, %29 : vector<8x64xf32>
    %32 = arith.addf %25, %31 : vector<8x64xf32>
    %33 = vector.extract_strided_slice %19 {offsets = [0, 2], sizes = [8, 1], strides = [1, 1]} : vector<8x8xf32> to vector<8x1xf32>
    %c0_13 = arith.constant 0 : index
    %c2 = arith.constant 2 : index
    %c0_14 = arith.constant 0 : index
    %34 = vector.load %arg2[%c0_13, %c2, %c0_14] : memref<8x8x64xbf16, #tpu.memory_space<vmem>>, vector<8x1x64xbf16>
    %35 = vector.shape_cast %34 : vector<8x1x64xbf16> to vector<8x64xbf16>
    %36 = arith.extf %35 : vector<8x64xbf16> to vector<8x64xf32>
    %37 = vector.broadcast %33 : vector<8x1xf32> to vector<8x64xf32>
    %38 = arith.mulf %37, %36 : vector<8x64xf32>
    %39 = arith.addf %32, %38 : vector<8x64xf32>
    %40 = vector.extract_strided_slice %19 {offsets = [0, 3], sizes = [8, 1], strides = [1, 1]} : vector<8x8xf32> to vector<8x1xf32>
    %c0_15 = arith.constant 0 : index
    %c3 = arith.constant 3 : index
    %c0_16 = arith.constant 0 : index
    %41 = vector.load %arg2[%c0_15, %c3, %c0_16] : memref<8x8x64xbf16, #tpu.memory_space<vmem>>, vector<8x1x64xbf16>
    %42 = vector.shape_cast %41 : vector<8x1x64xbf16> to vector<8x64xbf16>
    %43 = arith.extf %42 : vector<8x64xbf16> to vector<8x64xf32>
    %44 = vector.broadcast %40 : vector<8x1xf32> to vector<8x64xf32>
    %45 = arith.mulf %44, %43 : vector<8x64xf32>
    %46 = arith.addf %39, %45 : vector<8x64xf32>
    %47 = vector.extract_strided_slice %19 {offsets = [0, 4], sizes = [8, 1], strides = [1, 1]} : vector<8x8xf32> to vector<8x1xf32>
    %c0_17 = arith.constant 0 : index
    %c4 = arith.constant 4 : index
    %c0_18 = arith.constant 0 : index
    %48 = vector.load %arg2[%c0_17, %c4, %c0_18] : memref<8x8x64xbf16, #tpu.memory_space<vmem>>, vector<8x1x64xbf16>
    %49 = vector.shape_cast %48 : vector<8x1x64xbf16> to vector<8x64xbf16>
    %50 = arith.extf %49 : vector<8x64xbf16> to vector<8x64xf32>
    %51 = vector.broadcast %47 : vector<8x1xf32> to vector<8x64xf32>
    %52 = arith.mulf %51, %50 : vector<8x64xf32>
    %53 = arith.addf %46, %52 : vector<8x64xf32>
    %54 = vector.extract_strided_slice %19 {offsets = [0, 5], sizes = [8, 1], strides = [1, 1]} : vector<8x8xf32> to vector<8x1xf32>
    %c0_19 = arith.constant 0 : index
    %c5 = arith.constant 5 : index
    %c0_20 = arith.constant 0 : index
    %55 = vector.load %arg2[%c0_19, %c5, %c0_20] : memref<8x8x64xbf16, #tpu.memory_space<vmem>>, vector<8x1x64xbf16>
    %56 = vector.shape_cast %55 : vector<8x1x64xbf16> to vector<8x64xbf16>
    %57 = arith.extf %56 : vector<8x64xbf16> to vector<8x64xf32>
    %58 = vector.broadcast %54 : vector<8x1xf32> to vector<8x64xf32>
    %59 = arith.mulf %58, %57 : vector<8x64xf32>
    %60 = arith.addf %53, %59 : vector<8x64xf32>
    %61 = vector.extract_strided_slice %19 {offsets = [0, 6], sizes = [8, 1], strides = [1, 1]} : vector<8x8xf32> to vector<8x1xf32>
    %c0_21 = arith.constant 0 : index
    %c6 = arith.constant 6 : index
    %c0_22 = arith.constant 0 : index
    %62 = vector.load %arg2[%c0_21, %c6, %c0_22] : memref<8x8x64xbf16, #tpu.memory_space<vmem>>, vector<8x1x64xbf16>
    %63 = vector.shape_cast %62 : vector<8x1x64xbf16> to vector<8x64xbf16>
    %64 = arith.extf %63 : vector<8x64xbf16> to vector<8x64xf32>
    %65 = vector.broadcast %61 : vector<8x1xf32> to vector<8x64xf32>
    %66 = arith.mulf %65, %64 : vector<8x64xf32>
    %67 = arith.addf %60, %66 : vector<8x64xf32>
    %68 = vector.extract_strided_slice %19 {offsets = [0, 7], sizes = [8, 1], strides = [1, 1]} : vector<8x8xf32> to vector<8x1xf32>
    %c0_23 = arith.constant 0 : index
    %c7 = arith.constant 7 : index
    %c0_24 = arith.constant 0 : index
    %69 = vector.load %arg2[%c0_23, %c7, %c0_24] : memref<8x8x64xbf16, #tpu.memory_space<vmem>>, vector<8x1x64xbf16>
    %70 = vector.shape_cast %69 : vector<8x1x64xbf16> to vector<8x64xbf16>
    %71 = arith.extf %70 : vector<8x64xbf16> to vector<8x64xf32>
    %72 = vector.broadcast %68 : vector<8x1xf32> to vector<8x64xf32>
    %73 = arith.mulf %72, %71 : vector<8x64xf32>
    %74 = arith.addf %67, %73 : vector<8x64xf32>
    %c0_25 = arith.constant 0 : index
    %c8 = arith.constant 8 : index
    %75 = vector.load %arg4[%c0_25, %c8] : memref<64x40xf32, #tpu.memory_space<vmem>>, vector<64x32xf32>
    %cst_26 = arith.constant dense<0.000000e+00> : vector<8x32xf32>
    %76 = tpu.matmul %74, %75, %cst_26 {dimension_numbers = #tpu.dot_dimension_numbers<[1], [0], [0], [1], [0, 0, 1, 1], [], []>} : vector<8x64xf32>, vector<64x32xf32>, vector<8x32xf32> -> vector<8x32xf32>
    %c1_27 = arith.constant 1 : index
    %c0_28 = arith.constant 0 : index
    %77 = vector.load %arg5[%c1_27, %c0_28] : memref<7x32xf32, #tpu.memory_space<vmem>>, vector<1x32xf32>
    %78 = vector.broadcast %77 : vector<1x32xf32> to vector<8x32xf32>
    %79 = arith.addf %76, %78 : vector<8x32xf32>
    %c0_29 = arith.constant 0 : index
    %c0_30 = arith.constant 0 : index
    %80 = vector.load %arg3[%c0_29, %c0_30] : memref<8x2xf32, #tpu.memory_space<vmem>>, vector<8x2xf32>
    %81 = vector.extract_strided_slice %80 {offsets = [0, 0], sizes = [8, 1], strides = [1, 1]} : vector<8x2xf32> to vector<8x1xf32>
    %c5_31 = arith.constant 5 : index
    %c0_32 = arith.constant 0 : index
    %82 = vector.load %arg5[%c5_31, %c0_32] : memref<7x32xf32, #tpu.memory_space<vmem>>, vector<1x32xf32>
    %83 = vector.broadcast %81 : vector<8x1xf32> to vector<8x32xf32>
    %84 = vector.broadcast %82 : vector<1x32xf32> to vector<8x32xf32>
    %85 = arith.mulf %83, %84 : vector<8x32xf32>
    %86 = arith.addf %79, %85 : vector<8x32xf32>
    %87 = vector.extract_strided_slice %80 {offsets = [0, 1], sizes = [8, 1], strides = [1, 1]} : vector<8x2xf32> to vector<8x1xf32>
    %c6_33 = arith.constant 6 : index
    %c0_34 = arith.constant 0 : index
    %88 = vector.load %arg5[%c6_33, %c0_34] : memref<7x32xf32, #tpu.memory_space<vmem>>, vector<1x32xf32>
    %89 = vector.broadcast %87 : vector<8x1xf32> to vector<8x32xf32>
    %90 = vector.broadcast %88 : vector<1x32xf32> to vector<8x32xf32>
    %91 = arith.mulf %89, %90 : vector<8x32xf32>
    %92 = arith.addf %86, %91 : vector<8x32xf32>
    %cst_35 = arith.constant 0.000000e+00 : f32
    %93 = vector.broadcast %cst_35 : f32 to vector<8x32xf32>
    %94 = arith.maximumf %92, %93 : vector<8x32xf32>
    %cst_36 = arith.constant dense<0.000000e+00> : vector<8xf32>
    %95 = vector.multi_reduction <add>, %94, %cst_36 [1] : vector<8x32xf32> to vector<8xf32>
    %96 = vector.shape_cast %95 : vector<8xf32> to vector<8x1xf32>
    %cst_37 = arith.constant 3.200000e+01 : f32
    %97 = vector.broadcast %cst_37 : f32 to vector<8x1xf32>
    %98 = arith.divf %96, %97 : vector<8x1xf32>
    %99 = vector.broadcast %98 : vector<8x1xf32> to vector<8x32xf32>
    %100 = arith.subf %94, %99 : vector<8x32xf32>
    %101 = arith.mulf %100, %100 : vector<8x32xf32>
    %cst_38 = arith.constant dense<0.000000e+00> : vector<8xf32>
    %102 = vector.multi_reduction <add>, %101, %cst_38 [1] : vector<8x32xf32> to vector<8xf32>
    %103 = vector.shape_cast %102 : vector<8xf32> to vector<8x1xf32>
    %cst_39 = arith.constant 3.200000e+01 : f32
    %104 = vector.broadcast %cst_39 : f32 to vector<8x1xf32>
    %105 = arith.divf %103, %104 : vector<8x1xf32>
    %cst_40 = arith.constant 9.99999974E-6 : f32
    %106 = vector.broadcast %cst_40 : f32 to vector<8x1xf32>
    %107 = arith.addf %105, %106 : vector<8x1xf32>
    %108 = math.rsqrt %107 : vector<8x1xf32>
    %109 = vector.broadcast %108 : vector<8x1xf32> to vector<8x32xf32>
    %110 = arith.mulf %100, %109 : vector<8x32xf32>
    %c2_41 = arith.constant 2 : index
    %c0_42 = arith.constant 0 : index
    %111 = vector.load %arg5[%c2_41, %c0_42] : memref<7x32xf32, #tpu.memory_space<vmem>>, vector<1x32xf32>
    %112 = vector.broadcast %111 : vector<1x32xf32> to vector<8x32xf32>
    %113 = arith.mulf %110, %112 : vector<8x32xf32>
    %c3_43 = arith.constant 3 : index
    %c0_44 = arith.constant 0 : index
    %114 = vector.load %arg5[%c3_43, %c0_44] : memref<7x32xf32, #tpu.memory_space<vmem>>, vector<1x32xf32>
    %115 = vector.broadcast %114 : vector<1x32xf32> to vector<8x32xf32>
    %116 = arith.addf %113, %115 : vector<8x32xf32>
    %c0_45 = arith.constant 0 : index
    %c0_46 = arith.constant 0 : index
    %117 = vector.load %arg6[%c0_45, %c0_46] : memref<32x4xf32, #tpu.memory_space<vmem>>, vector<32x4xf32>
    %cst_47 = arith.constant dense<0.000000e+00> : vector<8x4xf32>
    %118 = tpu.matmul %116, %117, %cst_47 {dimension_numbers = #tpu.dot_dimension_numbers<[1], [0], [0], [1], [0, 0, 1, 1], [], []>} : vector<8x32xf32>, vector<32x4xf32>, vector<8x4xf32> -> vector<8x4xf32>
    %c4_48 = arith.constant 4 : index
    %c0_49 = arith.constant 0 : index
    %119 = vector.load %arg5[%c4_48, %c0_49] : memref<7x32xf32, #tpu.memory_space<vmem>>, vector<1x4xf32>
    %120 = vector.broadcast %119 : vector<1x4xf32> to vector<8x4xf32>
    %121 = arith.addf %118, %120 : vector<8x4xf32>
    %cst_50 = arith.constant 0.000000e+00 : f32
    %122 = vector.broadcast %cst_50 : f32 to vector<8x4xf32>
    %123 = arith.maximumf %121, %122 : vector<8x4xf32>
    %cst_51 = arith.constant dense<0xFF800000> : vector<8xf32>
    %124 = vector.multi_reduction <maximumf>, %123, %cst_51 [1] : vector<8x4xf32> to vector<8xf32>
    %125 = vector.shape_cast %124 : vector<8xf32> to vector<8x1xf32>
    %126 = vector.broadcast %125 : vector<8x1xf32> to vector<8x4xf32>
    %127 = arith.subf %123, %126 : vector<8x4xf32>
    %128 = math.exp %127 : vector<8x4xf32>
    %cst_52 = arith.constant dense<0.000000e+00> : vector<8xf32>
    %129 = vector.multi_reduction <add>, %128, %cst_52 [1] : vector<8x4xf32> to vector<8xf32>
    %130 = vector.shape_cast %129 : vector<8xf32> to vector<8x1xf32>
    %131 = tpu.reciprocal %130 {approx = true} : vector<8x1xf32> -> vector<8x1xf32>
    %132 = arith.mulf %130, %131 : vector<8x1xf32>
    %cst_53 = arith.constant 2.000000e+00 : f32
    %133 = vector.broadcast %cst_53 : f32 to vector<8x1xf32>
    %134 = arith.subf %133, %132 : vector<8x1xf32>
    %135 = arith.mulf %131, %134 : vector<8x1xf32>
    %136 = vector.broadcast %135 : vector<8x1xf32> to vector<8x4xf32>
    %137 = arith.mulf %128, %136 : vector<8x4xf32>
    %cst_54 = arith.constant 0.000000e+00 : f32
    %138 = vector.broadcast %cst_54 : f32 to vector<8x128xf32>
    %c0_55 = arith.constant 0 : index
    %c0_56 = arith.constant 0 : index
    %139 = vector.load %arg7[%c0_55, %c0_56] : memref<8x128xf32, #tpu.memory_space<vmem>>, vector<8x128xf32>
    tpu.vector_store %arg7[%c0_55, %c0_56], %138 {strides = array<i32>} : memref<8x128xf32, #tpu.memory_space<vmem>>, vector<8x128xf32>,
    %c0_57 = arith.constant 0 : index
    %c0_58 = arith.constant 0 : index
    %140 = vector.load %arg7[%c0_57, %c0_58] : memref<8x128xf32, #tpu.memory_space<vmem>>, vector<8x4xf32>
    tpu.vector_store %arg7[%c0_57, %c0_58], %137 {strides = array<i32>} : memref<8x128xf32, #tpu.memory_space<vmem>>, vector<8x4xf32>,
    %c0_59 = arith.constant 0 : index
    %c4_60 = arith.constant 4 : index
    %141 = vector.load %arg7[%c0_59, %c4_60] : memref<8x128xf32, #tpu.memory_space<vmem>>, vector<8x8xf32>
    tpu.vector_store %arg7[%c0_59, %c4_60], %19 {strides = array<i32>} : memref<8x128xf32, #tpu.memory_space<vmem>>, vector<8x8xf32>,
    return
  }
  func.func @transform_0(%arg0: i32) -> (i32, i32) {
    %c0_i32 = arith.constant 0 : i32
    %c0_i32_0 = arith.constant 0 : i32
    return %arg0, %c0_i32 : i32, i32
  }
  func.func @transform_1(%arg0: i32) -> (i32, i32, i32) {
    %c0_i32 = arith.constant 0 : i32
    %c0_i32_0 = arith.constant 0 : i32
    %c0_i32_1 = arith.constant 0 : i32
    return %arg0, %c0_i32, %c0_i32_0 : i32, i32, i32
  }
  func.func @transform_2(%arg0: i32) -> (i32, i32) {
    %c0_i32 = arith.constant 0 : i32
    %c0_i32_0 = arith.constant 0 : i32
    return %arg0, %c0_i32 : i32, i32
  }
  func.func @transform_3(%arg0: i32) -> (i32, i32) {
    %c0_i32 = arith.constant 0 : i32
    %c0_i32_0 = arith.constant 0 : i32
    %c0_i32_1 = arith.constant 0 : i32
    return %c0_i32, %c0_i32_0 : i32, i32
  }
  func.func @transform_4(%arg0: i32) -> (i32, i32) {
    %c0_i32 = arith.constant 0 : i32
    %c0_i32_0 = arith.constant 0 : i32
    %c0_i32_1 = arith.constant 0 : i32
    return %c0_i32, %c0_i32_0 : i32, i32
  }
  func.func @transform_5(%arg0: i32) -> (i32, i32) {
    %c0_i32 = arith.constant 0 : i32
    %c0_i32_0 = arith.constant 0 : i32
    %c0_i32_1 = arith.constant 0 : i32
    return %c0_i32, %c0_i32_0 : i32, i32
  }
  func.func @transform_6(%arg0: i32) -> (i32, i32) {
    %c0_i32 = arith.constant 0 : i32
    %c0_i32_0 = arith.constant 0 : i32
    return %arg0, %c0_i32 : i32, i32
  }
}

</mosaic_0001>

<llo_original>
// kernel: tpu_custom_call.1
$region0: #{tpu_custom_call.1}
  #allocation0 [shape = 'u32[]', space=smem, size = 0x4, offset = 0x4, fixed_abs, tag = 'smem constant byte address 0x4 - core index']
  #allocation1 [shape = 'u32[144,128]{1,0:T(1,128)}', space=vmem, size = 0x12000, scoped, tag = 'internal scratch']
  %s0 = inlined_call_operand.vmem [shape: f32[8,64], index: 0, kind: input, shape index: {}]
  %s1 = inlined_call_operand.vmem [shape: bf16[8,8,64], index: 1, kind: input, shape index: {}]
  %s2 = inlined_call_operand.vmem [shape: f32[8,2], index: 2, kind: input, shape index: {}]
  %s3 = inlined_call_operand.vmem [shape: f32[64,40], index: 3, kind: input, shape index: {}]
  %s4 = inlined_call_operand.vmem [shape: f32[7,32], index: 4, kind: input, shape index: {}]
  %s5 = inlined_call_operand.vmem [shape: f32[32,4], index: 5, kind: input, shape index: {}]
  %s6 = inlined_call_operand.hbm [shape: f32[8,128], index: 6, kind: output, shape index: {}]
  %s7 = sld [smem:[#allocation0]]
  $region34: #{tpu_custom_call.1} parent=0
    _
  %s9 = ssub.s32 1, %s7
  %s10 = scalar_select 0, %s9, %s7
  $region1: #{tpu_custom_call.1} parent=0
    #allocation2 [shape = 'u8[4096]{0}', space=vmem, size = 0x1000, scoped, tag = 'output window, operand 0, single buffered']
    #allocation3 [shape = 's32[1]{0}', space=sflag, size = 0x4, scoped, tag = 'scoped memory for tpu_custom_call.1']
    %11 = vsyncpa [#allocation3], 0
    // Predicated region
    $region2: #{tpu_custom_call.1} parent=1 // pred_check
      _
    $region3: #{tpu_custom_call.1} parent=1 // pred_check_branch
      %13 = sbr.rel (0) target = $region5
    $region4: #{tpu_custom_call.1} parent=1 // pred_region
      _
    $region5: #{tpu_custom_call.1} parent=1 // pred_fallthru
      _
    // Predicated region
    $region6: #{tpu_custom_call.1} parent=1 // pred_check
      _
    $region7: #{tpu_custom_call.1} parent=1 // pred_check_branch
      %15 = sbr.rel (0) target = $region9
    $region8: #{tpu_custom_call.1} parent=1 // pred_region
      _
    $region9: #{tpu_custom_call.1} parent=1 // pred_fallthru
      _
    // Predicated region
    $region10: #{tpu_custom_call.1} parent=1 // pred_check
      _
    $region11: #{tpu_custom_call.1} parent=1 // pred_check_branch
      %17 = sbr.rel (0) target = $region13
    $region12: #{tpu_custom_call.1} parent=1 // pred_region
      _
    $region13: #{tpu_custom_call.1} parent=1 // pred_fallthru
      _
    // Predicated region
    $region14: #{tpu_custom_call.1} parent=1 // pred_check
      _
    $region15: #{tpu_custom_call.1} parent=1 // pred_check_branch
      %19 = sbr.rel (0) target = $region17
    $region16: #{tpu_custom_call.1} parent=1 // pred_region
      _
    $region17: #{tpu_custom_call.1} parent=1 // pred_fallthru
      _
    // Predicated region
    $region18: #{tpu_custom_call.1} parent=1 // pred_check
      _
    $region19: #{tpu_custom_call.1} parent=1 // pred_check_branch
      %21 = sbr.rel (0) target = $region21
    $region20: #{tpu_custom_call.1} parent=1 // pred_region
      _
    $region21: #{tpu_custom_call.1} parent=1 // pred_fallthru
      _
    // Predicated region
    $region22: #{tpu_custom_call.1} parent=1 // pred_check
      _
    $region23: #{tpu_custom_call.1} parent=1 // pred_check_branch
      %23 = sbr.rel (0) target = $region25
    $region24: #{tpu_custom_call.1} parent=1 // pred_region
      _
    $region25: #{tpu_custom_call.1} parent=1 // pred_fallthru
      _
    %v24 = vld [vmem:[%s0] sm:$0xff]
    %v25 = vld [vmem:[%s3] sm:$0xff]
    %v26 = vld [vmem:[%s3 + $0x8] sm:$0xff]
    %v27 = vld [vmem:[%s3 + $0x10] sm:$0xff]
    %v28 = vld [vmem:[%s3 + $0x18] sm:$0xff]
    %v29 = vld [vmem:[%s3 + $0x20] sm:$0xff]
    %v30 = vld [vmem:[%s3 + $0x28] sm:$0xff]
    %v31 = vld [vmem:[%s3 + $0x30] sm:$0xff]
    %v32 = vld [vmem:[%s3 + $0x38] sm:$0xff]
    %v33 = vld [vmem:[%s4] sm:$0x1]
    %v34 = vlaneseq
    %v35 = vshrl.u32 %v34, 7
    %v36 = vsub.s32 0, %v35
    %v37 = vrot.slane %v33, %v36
    %vm38 = vcmask 523264
    %v40 = vsel %vm38, %v24, 0
    %42 = vmatprep.subr.mxu0 0.0
    %43 = vmatpush1.msra.mxu0 %v25
    %44 = vmatprep.subr.mxu0 0.0
    %45 = vmatpush1.msra.mxu0 %v26
    %46 = vmatprep.subr.mxu0 0.0
    %47 = vmatpush1.msra.mxu0 %v27
    %48 = vmatprep.subr.mxu0 0.0
    %49 = vmatpush1.msra.mxu0 %v28
    %50 = vmatprep.subr.mxu0 0.0
    %51 = vmatpush1.msra.mxu0 %v29
    %52 = vmatprep.subr.mxu0 0.0
    %53 = vmatpush1.msra.mxu0 %v30
    %54 = vmatprep.subr.mxu0 0.0
    %55 = vmatpush1.msra.mxu0 %v31
    %56 = vmatprep.subr.mxu0 0.0
    %57 = vmatpush1.msra.mxu0 %v32
    %58 = vmatprep.subr.mxu0 0.0
    %59 = vmatpush1.msra.mxu0 0.0
    %60 = vmatprep.subr.mxu0 0.0
    %61 = vmatpush1.msra.mxu0 0.0
    %62 = vmatprep.subr.mxu0 0.0
    %63 = vmatpush1.msra.mxu0 0.0
    %64 = vmatprep.subr.mxu0 0.0
    %65 = vmatpush1.msra.mxu0 0.0
    %66 = vmatprep.subr.mxu0 0.0
    %67 = vmatpush1.msra.mxu0 0.0
    %68 = vmatprep.subr.mxu0 0.0
    %69 = vmatpush1.msra.mxu0 0.0
    %70 = vmatprep.subr.mxu0 0.0
    %71 = vmatpush1.msra.mxu0 0.0
    %72 = vmatprep.subr.mxu0 0.0
    %73 = vmatpush1.msra.mxu0 0.0
    %74 = vmatprep.subr.mxu0 0.0
    %75 = vmatpush1.msra.mxu0 0.0
    %76 = vmatprep.subr.mxu0 0.0
    %77 = vmatpush1.msra.mxu0 0.0
    %78 = vmatprep.subr.mxu0 0.0
    %79 = vmatpush1.msra.mxu0 0.0
    %80 = vmatprep.subr.mxu0 0.0
    %81 = vmatpush1.msra.mxu0 0.0
    %82 = vmatprep.subr.mxu0 0.0
    %83 = vmatpush1.msra.mxu0 0.0
    %84 = vmatprep.subr.mxu0 0.0
    %85 = vmatpush1.msra.mxu0 0.0
    %86 = vmatprep.subr.mxu0 0.0
    %87 = vmatpush1.msra.mxu0 0.0
    %88 = vmatprep.subr.mxu0 0.0
    %89 = vmatpush1.msra.mxu0 0.0
    %90 = vmatprep.subr.mxu0 0.0
    %91 = vmatpush1.msra.mxu0 0.0
    %92 = vmatprep.subr.mxu0 0.0
    %93 = vmatpush1.msra.mxu0 0.0
    %94 = vmatprep.subr.mxu0 0.0
    %95 = vmatpush1.msra.mxu0 0.0
    %96 = vmatprep.subr.mxu0 0.0
    %97 = vmatpush1.msra.mxu0 0.0
    %98 = vmatprep.subr.mxu0 0.0
    %99 = vmatpush1.msra.mxu0 0.0
    %100 = vmatprep.subr.mxu0 0.0
    %101 = vmatpush1.msra.mxu0 0.0
    %102 = vmatprep.subr.mxu0 0.0
    %103 = vmatpush1.msra.mxu0 0.0
    %104 = vmatprep.subr.mxu0 0.0
    %105 = vmatpush1.msra.mxu0 0.0
    %106 = vmatprep.mubr.f32.mxu0 0.0
    %107 = vmatmul.mubr.f32.gmra.mrb[0].mxu0 %v40
    %v108 = vpop.f32.mrb[0].mxu0
    %v109 = vadd.f32 %v37, %v108
    %v110 = vpop.f32.mrb[0].mxu0
    %111 = vdwg.mxu0
    %vm112 = vcmask 64512
    %v113 = vsel %vm112, %v109, -inf
    %114 = vmax.xlane.f32.xlu0 %v113
    %v115 = vpop.xlane.xlu0 %114
    %v116 = vsub.f32 %v109, %v115
    %v117 = vmul.f32 %v116, 1.442695
    %v118 = vpow.pop %v117
    %v119 = vsel %vm112, %v118, 0.0
    %120 = vadd.xlane.f32.xlu0 %v119
    %v121 = vpop.xlane.xlu0 %120
    %v122 = vrcp.pop %v121
    %v123 = vmul.f32 %v121, %v122
    %v124 = vsub.f32 2.0, %v123
    %v125 = vmul.f32 %v122, %v124
    %v126 = vmul.f32 %v118, %v125
    %v127 = vld [vmem:[%s1] sm:$0x1]
    %v128 = vld [vmem:[%s1 + $0x4] sm:$0x1]
    %v129 = vld [vmem:[%s1 + $0x8] sm:$0x1]
    %v130 = vld [vmem:[%s1 + $0xc] sm:$0x1]
    %v131 = vld [vmem:[%s1 + $0x10] sm:$0x1]
    %v132 = vld [vmem:[%s1 + $0x14] sm:$0x1]
    %v133 = vld [vmem:[%s1 + $0x18] sm:$0x1]
    %v134 = vld [vmem:[%s1 + $0x1c] sm:$0x1]
    %v135 = vunpack.c.l.bf16 %v127
    %v136 = vunpack.c.l.bf16 %v128
    %v137 = vunpack.c.l.bf16 %v129
    %v138 = vunpack.c.l.bf16 %v130
    %v139 = vunpack.c.l.bf16 %v131
    %v140 = vunpack.c.l.bf16 %v132
    %v141 = vunpack.c.l.bf16 %v133
    %v142 = vunpack.c.l.bf16 %v134
    %144 = vset.pattern.permute.xlu0 0
    %145 = vperm.xlu0 %144, %v126
    %v146 = vpop.permute.xlu0 %145
    %v156 = vrot.slane %v136, 7
    %vm157 = vcmask 1041409
    %v158 = vsel %vm157, %v156, %v135
    %v159 = vrot.slane %v137, 6
    %vm160 = vcmask 1042434
    %v161 = vsel %vm160, %v159, %v158
    %v162 = vrot.slane %v138, 5
    %vm163 = vcmask 1043459
    %v164 = vsel %vm163, %v162, %v161
    %v165 = vrot.slane %v139, 4
    %vm166 = vcmask 1044484
    %v167 = vsel %vm166, %v165, %v164
    %v168 = vrot.slane %v140, 3
    %vm169 = vcmask 1045509
    %v170 = vsel %vm169, %v168, %v167
    %v171 = vrot.slane %v141, 2
    %vm172 = vcmask 1046534
    %v173 = vsel %vm172, %v171, %v170
    %v174 = vrot.slane %v142, 1
    %vm175 = vcmask 1047559
    %v176 = vsel %vm175, %v174, %v173
    %v178 = vmul.f32 %v146, %v176
    %179 = vset.pattern.permute.xlu0 1
    %180 = vperm.xlu0 %179, %v126
    %v181 = vpop.permute.xlu0 %180
    %v183 = vrot.slane %v135, 1
    %v184 = vsel %vm157, %v136, %v183
    %v185 = vrot.slane %v137, 7
    %v186 = vsel %vm160, %v185, %v184
    %v187 = vrot.slane %v138, 6
    %v188 = vsel %vm163, %v187, %v186
    %v189 = vrot.slane %v139, 5
    %v190 = vsel %vm166, %v189, %v188
    %v191 = vrot.slane %v140, 4
    %v192 = vsel %vm169, %v191, %v190
    %v193 = vrot.slane %v141, 3
    %v194 = vsel %vm172, %v193, %v192
    %v195 = vrot.slane %v142, 2
    %v196 = vsel %vm175, %v195, %v194
    %v198 = vmul.f32 %v181, %v196
    %v199 = vadd.f32 %v178, %v198
    %v200 = vld [vmem:[%s1] sm:$0x2]
    %v201 = vld [vmem:[%s1 + $0x4] sm:$0x2]
    %v202 = vld [vmem:[%s1 + $0x8] sm:$0x2]
    %v203 = vld [vmem:[%s1 + $0xc] sm:$0x2]
    %v204 = vld [vmem:[%s1 + $0x10] sm:$0x2]
    %v205 = vld [vmem:[%s1 + $0x14] sm:$0x2]
    %v206 = vld [vmem:[%s1 + $0x18] sm:$0x2]
    %v207 = vld [vmem:[%s1 + $0x1c] sm:$0x2]
    %v208 = vunpack.c.l.bf16 %v200
    %v209 = vunpack.c.l.bf16 %v201
    %v210 = vunpack.c.l.bf16 %v202
    %v211 = vunpack.c.l.bf16 %v203
    %v212 = vunpack.c.l.bf16 %v204
    %v213 = vunpack.c.l.bf16 %v205
    %v214 = vunpack.c.l.bf16 %v206
    %v215 = vunpack.c.l.bf16 %v207
    %216 = vset.pattern.permute.xlu0 2
    %217 = vperm.xlu0 %216, %v126
    %v218 = vpop.permute.xlu0 %217
    %v228 = vrot.slane %v208, 2
    %v229 = vrot.slane %v209, 1
    %v230 = vsel %vm157, %v229, %v228
    %v231 = vsel %vm160, %v210, %v230
    %v232 = vrot.slane %v211, 7
    %v233 = vsel %vm163, %v232, %v231
    %v234 = vrot.slane %v212, 6
    %v235 = vsel %vm166, %v234, %v233
    %v236 = vrot.slane %v213, 5
    %v237 = vsel %vm169, %v236, %v235
    %v238 = vrot.slane %v214, 4
    %v239 = vsel %vm172, %v238, %v237
    %v240 = vrot.slane %v215, 3
    %v241 = vsel %vm175, %v240, %v239
    %v243 = vmul.f32 %v218, %v241
    %v244 = vadd.f32 %v199, %v243
    %245 = vset.pattern.permute.xlu0 3
    %246 = vperm.xlu0 %245, %v126
    %v247 = vpop.permute.xlu0 %246
    %v249 = vrot.slane %v208, 3
    %v250 = vrot.slane %v209, 2
    %v251 = vsel %vm157, %v250, %v249
    %v252 = vrot.slane %v210, 1
    %v253 = vsel %vm160, %v252, %v251
    %v254 = vsel %vm163, %v211, %v253
    %v255 = vrot.slane %v212, 7
    %v256 = vsel %vm166, %v255, %v254
    %v257 = vrot.slane %v213, 6
    %v258 = vsel %vm169, %v257, %v256
    %v259 = vrot.slane %v214, 5
    %v260 = vsel %vm172, %v259, %v258
    %v261 = vrot.slane %v215, 4
    %v262 = vsel %vm175, %v261, %v260
    %v264 = vmul.f32 %v247, %v262
    %v265 = vadd.f32 %v244, %v264
    %v266 = vld [vmem:[%s1] sm:$0x4]
    %v267 = vld [vmem:[%s1 + $0x4] sm:$0x4]
    %v268 = vld [vmem:[%s1 + $0x8] sm:$0x4]
    %v269 = vld [vmem:[%s1 + $0xc] sm:$0x4]
    %v270 = vld [vmem:[%s1 + $0x10] sm:$0x4]
    %v271 = vld [vmem:[%s1 + $0x14] sm:$0x4]
    %v272 = vld [vmem:[%s1 + $0x18] sm:$0x4]
    %v273 = vld [vmem:[%s1 + $0x1c] sm:$0x4]
    %v274 = vunpack.c.l.bf16 %v266
    %v275 = vunpack.c.l.bf16 %v267
    %v276 = vunpack.c.l.bf16 %v268
    %v277 = vunpack.c.l.bf16 %v269
    %v278 = vunpack.c.l.bf16 %v270
    %v279 = vunpack.c.l.bf16 %v271
    %v280 = vunpack.c.l.bf16 %v272
    %v281 = vunpack.c.l.bf16 %v273
    %282 = vset.pattern.permute.xlu0 4
    %283 = vperm.xlu0 %282, %v126
    %v284 = vpop.permute.xlu0 %283
    %v294 = vrot.slane %v274, 4
    %v295 = vrot.slane %v275, 3
    %v296 = vsel %vm157, %v295, %v294
    %v297 = vrot.slane %v276, 2
    %v298 = vsel %vm160, %v297, %v296
    %v299 = vrot.slane %v277, 1
    %v300 = vsel %vm163, %v299, %v298
    %v301 = vsel %vm166, %v278, %v300
    %v302 = vrot.slane %v279, 7
    %v303 = vsel %vm169, %v302, %v301
    %v304 = vrot.slane %v280, 6
    %v305 = vsel %vm172, %v304, %v303
    %v306 = vrot.slane %v281, 5
    %v307 = vsel %vm175, %v306, %v305
    %v309 = vmul.f32 %v284, %v307
    %v310 = vadd.f32 %v265, %v309
    %311 = vset.pattern.permute.xlu0 5
    %312 = vperm.xlu0 %311, %v126
    %v313 = vpop.permute.xlu0 %312
    %v315 = vrot.slane %v274, 5
    %v316 = vrot.slane %v275, 4
    %v317 = vsel %vm157, %v316, %v315
    %v318 = vrot.slane %v276, 3
    %v319 = vsel %vm160, %v318, %v317
    %v320 = vrot.slane %v277, 2
    %v321 = vsel %vm163, %v320, %v319
    %v322 = vrot.slane %v278, 1
    %v323 = vsel %vm166, %v322, %v321
    %v324 = vsel %vm169, %v279, %v323
    %v325 = vrot.slane %v280, 7
    %v326 = vsel %vm172, %v325, %v324
    %v327 = vrot.slane %v281, 6
    %v328 = vsel %vm175, %v327, %v326
    %v330 = vmul.f32 %v313, %v328
    %v331 = vadd.f32 %v310, %v330
    %v332 = vld [vmem:[%s1] sm:$0x8]
    %v333 = vld [vmem:[%s1 + $0x4] sm:$0x8]
    %v334 = vld [vmem:[%s1 + $0x8] sm:$0x8]
    %v335 = vld [vmem:[%s1 + $0xc] sm:$0x8]
    %v336 = vld [vmem:[%s1 + $0x10] sm:$0x8]
    %v337 = vld [vmem:[%s1 + $0x14] sm:$0x8]
    %v338 = vld [vmem:[%s1 + $0x18] sm:$0x8]
    %v339 = vld [vmem:[%s1 + $0x1c] sm:$0x8]
    %v340 = vunpack.c.l.bf16 %v332
    %v341 = vunpack.c.l.bf16 %v333
    %v342 = vunpack.c.l.bf16 %v334
    %v343 = vunpack.c.l.bf16 %v335
    %v344 = vunpack.c.l.bf16 %v336
    %v345 = vunpack.c.l.bf16 %v337
    %v346 = vunpack.c.l.bf16 %v338
    %v347 = vunpack.c.l.bf16 %v339
    %348 = vset.pattern.permute.xlu0 6
    %349 = vperm.xlu0 %348, %v126
    %v350 = vpop.permute.xlu0 %349
    %v360 = vrot.slane %v340, 6
    %v361 = vrot.slane %v341, 5
    %v362 = vsel %vm157, %v361, %v360
    %v363 = vrot.slane %v342, 4
    %v364 = vsel %vm160, %v363, %v362
    %v365 = vrot.slane %v343, 3
    %v366 = vsel %vm163, %v365, %v364
    %v367 = vrot.slane %v344, 2
    %v368 = vsel %vm166, %v367, %v366
    %v369 = vrot.slane %v345, 1
    %v370 = vsel %vm169, %v369, %v368
    %v371 = vsel %vm172, %v346, %v370
    %v372 = vrot.slane %v347, 7
    %v373 = vsel %vm175, %v372, %v371
    %v375 = vmul.f32 %v350, %v373
    %v376 = vadd.f32 %v331, %v375
    %377 = vset.pattern.permute.xlu0 7
    %378 = vperm.xlu0 %377, %v126
    %v379 = vpop.permute.xlu0 %378
    %v381 = vrot.slane %v340, 7
    %v382 = vrot.slane %v341, 6
    %v383 = vsel %vm157, %v382, %v381
    %v384 = vrot.slane %v342, 5
    %v385 = vsel %vm160, %v384, %v383
    %v386 = vrot.slane %v343, 4
    %v387 = vsel %vm163, %v386, %v385
    %v388 = vrot.slane %v344, 3
    %v389 = vsel %vm166, %v388, %v387
    %v390 = vrot.slane %v345, 2
    %v391 = vsel %vm169, %v390, %v389
    %v392 = vrot.slane %v346, 1
    %v393 = vsel %vm172, %v392, %v391
    %v394 = vsel %vm175, %v347, %v393
    %v396 = vmul.f32 %v379, %v394
    %v397 = vadd.f32 %v376, %v396
    %v398 = vld [vmem:[%s4 + $0x1] sm:$0x1]
    %v399 = vlaneseq
    %v400 = vshrl.u32 %v399, 7
    %v401 = vsub.s32 0, %v400
    %v402 = vrot.slane %v398, %v401
    %411 = vrot.lane.b32.xlu0 %v25, 120
    %v412 = vpop.permute.xlu0 %411
    %413 = vrot.lane.b32.xlu0 %v26, 120
    %v414 = vpop.permute.xlu0 %413
    %415 = vrot.lane.b32.xlu0 %v27, 120
    %v416 = vpop.permute.xlu0 %415
    %417 = vrot.lane.b32.xlu0 %v28, 120
    %v418 = vpop.permute.xlu0 %417
    %419 = vrot.lane.b32.xlu0 %v29, 120
    %v420 = vpop.permute.xlu0 %419
    %421 = vrot.lane.b32.xlu0 %v30, 120
    %v422 = vpop.permute.xlu0 %421
    %423 = vrot.lane.b32.xlu0 %v31, 120
    %v424 = vpop.permute.xlu0 %423
    %425 = vrot.lane.b32.xlu0 %v32, 120
    %v426 = vpop.permute.xlu0 %425
    %v436 = vsel %vm38, %v397, 0
    %438 = vmatprep.subr.mxu0 0.0
    %439 = vmatpush1.msra.mxu0 %v412
    %440 = vmatprep.subr.mxu0 0.0
    %441 = vmatpush1.msra.mxu0 %v414
    %442 = vmatprep.subr.mxu0 0.0
    %443 = vmatpush1.msra.mxu0 %v416
    %444 = vmatprep.subr.mxu0 0.0
    %445 = vmatpush1.msra.mxu0 %v418
    %446 = vmatprep.subr.mxu0 0.0
    %447 = vmatpush1.msra.mxu0 %v420
    %448 = vmatprep.subr.mxu0 0.0
    %449 = vmatpush1.msra.mxu0 %v422
    %450 = vmatprep.subr.mxu0 0.0
    %451 = vmatpush1.msra.mxu0 %v424
    %452 = vmatprep.subr.mxu0 0.0
    %453 = vmatpush1.msra.mxu0 %v426
    %454 = vmatprep.subr.mxu0 0.0
    %455 = vmatpush1.msra.mxu0 0.0
    %456 = vmatprep.subr.mxu0 0.0
    %457 = vmatpush1.msra.mxu0 0.0
    %458 = vmatprep.subr.mxu0 0.0
    %459 = vmatpush1.msra.mxu0 0.0
    %460 = vmatprep.subr.mxu0 0.0
    %461 = vmatpush1.msra.mxu0 0.0
    %462 = vmatprep.subr.mxu0 0.0
    %463 = vmatpush1.msra.mxu0 0.0
    %464 = vmatprep.subr.mxu0 0.0
    %465 = vmatpush1.msra.mxu0 0.0
    %466 = vmatprep.subr.mxu0 0.0
    %467 = vmatpush1.msra.mxu0 0.0
    %468 = vmatprep.subr.mxu0 0.0
    %469 = vmatpush1.msra.mxu0 0.0
    %470 = vmatprep.subr.mxu0 0.0
    %471 = vmatpush1.msra.mxu0 0.0
    %472 = vmatprep.subr.mxu0 0.0
    %473 = vmatpush1.msra.mxu0 0.0
    %474 = vmatprep.subr.mxu0 0.0
    %475 = vmatpush1.msra.mxu0 0.0
    %476 = vmatprep.subr.mxu0 0.0
    %477 = vmatpush1.msra.mxu0 0.0
    %478 = vmatprep.subr.mxu0 0.0
    %479 = vmatpush1.msra.mxu0 0.0
    %480 = vmatprep.subr.mxu0 0.0
    %481 = vmatpush1.msra.mxu0 0.0
    %482 = vmatprep.subr.mxu0 0.0
    %483 = vmatpush1.msra.mxu0 0.0
    %484 = vmatprep.subr.mxu0 0.0
    %485 = vmatpush1.msra.mxu0 0.0
    %486 = vmatprep.subr.mxu0 0.0
    %487 = vmatpush1.msra.mxu0 0.0
    %488 = vmatprep.subr.mxu0 0.0
    %489 = vmatpush1.msra.mxu0 0.0
    %490 = vmatprep.subr.mxu0 0.0
    %491 = vmatpush1.msra.mxu0 0.0
    %492 = vmatprep.subr.mxu0 0.0
    %493 = vmatpush1.msra.mxu0 0.0
    %494 = vmatprep.subr.mxu0 0.0
    %495 = vmatpush1.msra.mxu0 0.0
    %496 = vmatprep.subr.mxu0 0.0
    %497 = vmatpush1.msra.mxu0 0.0
    %498 = vmatprep.subr.mxu0 0.0
    %499 = vmatpush1.msra.mxu0 0.0
    %500 = vmatprep.subr.mxu0 0.0
    %501 = vmatpush1.msra.mxu0 0.0
    %502 = vmatprep.mubr.f32.mxu0 0.0
    %503 = vmatmul.mubr.f32.gmra.mrb[0].mxu0 %v436
    %v504 = vpop.f32.mrb[0].mxu0
    %v505 = vadd.f32 %v402, %v504
    %v506 = vpop.f32.mrb[0].mxu0
    %507 = vdwg.mxu0
    %v508 = vld [vmem:[%s2] sm:$0xff]
    %v509 = vld [vmem:[%s4 + $0x5] sm:$0x1]
    %511 = vset.pattern.permute.xlu0 0
    %512 = vperm.xlu0 %511, %v508
    %v513 = vpop.permute.xlu0 %512
    %v515 = vlaneseq
    %v516 = vshrl.u32 %v515, 7
    %v517 = vsub.s32 0, %v516
    %v518 = vrot.slane %v509, %v517
    %v519 = vmul.f32 %v513, %v518
    %v520 = vadd.f32 %v505, %v519
    %v521 = vld [vmem:[%s4 + $0x6] sm:$0x1]
    %522 = vset.pattern.permute.xlu0 1
    %523 = vperm.xlu0 %522, %v508
    %v524 = vpop.permute.xlu0 %523
    %v526 = vlaneseq
    %v527 = vshrl.u32 %v526, 7
    %v528 = vsub.s32 0, %v527
    %v529 = vrot.slane %v521, %v528
    %v530 = vmul.f32 %v524, %v529
    %v531 = vadd.f32 %v520, %v530
    %v532 = vmax.f32 %v531, 0.0
    %vm533 = vcmask 261120
    %v534 = vsel %vm533, %v532, 0.0
    %535 = vadd.xlane.f32.xlu0 %v534
    %v536 = vpop.xlane.xlu0 %535
    %v537 = vrcp.pop 32.0
    %v538 = vmul.f32 %v536, %v537
    %v539 = vsub.f32 %v532, %v538
    %v540 = vmul.f32 %v539, %v539
    %v541 = vsel %vm533, %v540, 0.0
    %542 = vadd.xlane.f32.xlu0 %v541
    %v543 = vpop.xlane.xlu0 %542
    %v544 = vmul.f32 %v543, %v537
    %v545 = vadd.f32 %v544, 1e-05
    %v546 = vrsqrt.pop %v545
    %v547 = vmul.f32 %v539, %v546
    %v548 = vld [vmem:[%s4 + $0x2] sm:$0x1]
    %v549 = vlaneseq
    %v550 = vshrl.u32 %v549, 7
    %v551 = vsub.s32 0, %v550
    %v552 = vrot.slane %v548, %v551
    %v553 = vmul.f32 %v547, %v552
    %v554 = vld [vmem:[%s4 + $0x3] sm:$0x1]
    %v555 = vlaneseq
    %v556 = vshrl.u32 %v555, 7
    %v557 = vsub.s32 0, %v556
    %v558 = vrot.slane %v554, %v557
    %v559 = vadd.f32 %v553, %v558
    %v560 = vld [vmem:[%s5] sm:$0xff]
    %v561 = vld [vmem:[%s5 + $0x8] sm:$0xff]
    %v562 = vld [vmem:[%s5 + $0x10] sm:$0xff]
    %v563 = vld [vmem:[%s5 + $0x18] sm:$0xff]
    %v564 = vld [vmem:[%s4 + $0x4] sm:$0x1]
    %v565 = vlaneseq
    %v566 = vshrl.u32 %v565, 7
    %v567 = vsub.s32 0, %v566
    %v568 = vrot.slane %v564, %v567
    %v570 = vsel %vm533, %v559, 0
    %572 = vmatprep.subr.mxu0 0.0
    %573 = vmatpush1.msra.mxu0 %v560
    %574 = vmatprep.subr.mxu0 0.0
    %575 = vmatpush1.msra.mxu0 %v561
    %576 = vmatprep.subr.mxu0 0.0
    %577 = vmatpush1.msra.mxu0 %v562
    %578 = vmatprep.subr.mxu0 0.0
    %579 = vmatpush1.msra.mxu0 %v563
    %580 = vmatprep.subr.mxu0 0.0
    %581 = vmatpush1.msra.mxu0 0.0
    %582 = vmatprep.subr.mxu0 0.0
    %583 = vmatpush1.msra.mxu0 0.0
    %584 = vmatprep.subr.mxu0 0.0
    %585 = vmatpush1.msra.mxu0 0.0
    %586 = vmatprep.subr.mxu0 0.0
    %587 = vmatpush1.msra.mxu0 0.0
    %588 = vmatprep.subr.mxu0 0.0
    %589 = vmatpush1.msra.mxu0 0.0
    %590 = vmatprep.subr.mxu0 0.0
    %591 = vmatpush1.msra.mxu0 0.0
    %592 = vmatprep.subr.mxu0 0.0
    %593 = vmatpush1.msra.mxu0 0.0
    %594 = vmatprep.subr.mxu0 0.0
    %595 = vmatpush1.msra.mxu0 0.0
    %596 = vmatprep.subr.mxu0 0.0
    %597 = vmatpush1.msra.mxu0 0.0
    %598 = vmatprep.subr.mxu0 0.0
    %599 = vmatpush1.msra.mxu0 0.0
    %600 = vmatprep.subr.mxu0 0.0
    %601 = vmatpush1.msra.mxu0 0.0
    %602 = vmatprep.subr.mxu0 0.0
    %603 = vmatpush1.msra.mxu0 0.0
    %604 = vmatprep.subr.mxu0 0.0
    %605 = vmatpush1.msra.mxu0 0.0
    %606 = vmatprep.subr.mxu0 0.0
    %607 = vmatpush1.msra.mxu0 0.0
    %608 = vmatprep.subr.mxu0 0.0
    %609 = vmatpush1.msra.mxu0 0.0
    %610 = vmatprep.subr.mxu0 0.0
    %611 = vmatpush1.msra.mxu0 0.0
    %612 = vmatprep.subr.mxu0 0.0
    %613 = vmatpush1.msra.mxu0 0.0
    %614 = vmatprep.subr.mxu0 0.0
    %615 = vmatpush1.msra.mxu0 0.0
    %616 = vmatprep.subr.mxu0 0.0
    %617 = vmatpush1.msra.mxu0 0.0
    %618 = vmatprep.subr.mxu0 0.0
    %619 = vmatpush1.msra.mxu0 0.0
    %620 = vmatprep.subr.mxu0 0.0
    %621 = vmatpush1.msra.mxu0 0.0
    %622 = vmatprep.subr.mxu0 0.0
    %623 = vmatpush1.msra.mxu0 0.0
    %624 = vmatprep.subr.mxu0 0.0
    %625 = vmatpush1.msra.mxu0 0.0
    %626 = vmatprep.subr.mxu0 0.0
    %627 = vmatpush1.msra.mxu0 0.0
    %628 = vmatprep.subr.mxu0 0.0
    %629 = vmatpush1.msra.mxu0 0.0
    %630 = vmatprep.subr.mxu0 0.0
    %631 = vmatpush1.msra.mxu0 0.0
    %632 = vmatprep.subr.mxu0 0.0
    %633 = vmatpush1.msra.mxu0 0.0
    %634 = vmatprep.subr.mxu0 0.0
    %635 = vmatpush1.msra.mxu0 0.0
    %636 = vmatprep.mubr.f32.mxu0 0.0
    %637 = vmatmul.mubr.f32.gmra.mrb[0].mxu0 %v570
    %v638 = vpop.f32.mrb[0].mxu0
    %v639 = vadd.f32 %v568, %v638
    %v640 = vpop.f32.mrb[0].mxu0
    %641 = vdwg.mxu0
    %v642 = vmax.f32 %v639, 0.0
    %vm643 = vcmask 31744
    %v644 = vsel %vm643, %v642, -inf
    %645 = vmax.xlane.f32.xlu0 %v644
    %v646 = vpop.xlane.xlu0 %645
    %v647 = vsub.f32 %v642, %v646
    %v648 = vmul.f32 %v647, 1.442695
    %v649 = vpow.pop %v648
    %v650 = vsel %vm643, %v649, 0.0
    %651 = vadd.xlane.f32.xlu0 %v650
    %v652 = vpop.xlane.xlu0 %651
    %v653 = vrcp.pop %v652
    %v654 = vmul.f32 %v652, %v653
    %v655 = vsub.f32 2.0, %v654
    %v656 = vmul.f32 %v653, %v655
    %v657 = vmul.f32 %v649, %v656
    %658 = vst [vmem:[#allocation2] sm:$0xff] 0.0
    %659 = vst.msk [vmem:[#allocation2] sm:$0xff] %vm643, %v657
    %660 = vrot.lane.b32.xlu0 %v126, 4
    %v661 = vpop.permute.xlu0 %660
    %vm663 = vcmask 97312
    %664 = vst.msk [vmem:[#allocation2] sm:$0xff] %vm663, %v661
    // Predicated region
    $region26: #{tpu_custom_call.1} parent=1 // pred_check
      _
    $region27: #{tpu_custom_call.1} parent=1 // pred_check_branch
      %666 = sbr.rel (0) target = $region29
    $region28: #{tpu_custom_call.1} parent=1 // pred_region
      %s668 = ssub.s32 128, 128
      %669 = vsyncadd [#allocation3], %s668
      %s671 = sshll.u32 [#allocation2], 4
      %s672 = int_to_ptr.vmem [resolvable:$true] %s671
      %674 = dma.vmem_to_hbm [thread:$0]  %s672, 128, %s6, [#allocation3]
    $region29: #{tpu_custom_call.1} parent=1 // pred_fallthru
      _
    // Predicated region
    $region30: #{tpu_custom_call.1} parent=1 // pred_check
      _
    $region31: #{tpu_custom_call.1} parent=1 // pred_check_branch
      %676 = sbr.rel (0) target = $region33
    $region32: #{tpu_custom_call.1} parent=1 // pred_region
      %677 = dma.done [#allocation3], 128
    $region33: #{tpu_custom_call.1} parent=1 // pred_fallthru
      _
    %678 = vsyncpa [#allocation3], 1

</llo_original>
